<compile_context>
chip_gen: v5e
topology: v5e:2x2
jax: 0.10.0
libtpu: 0.0.40
codegen_flags: <defaults>
</compile_context>

<pallas_src>
import functools
import math

import jax
import jax.numpy as jnp
from jax import lax
from jax.experimental import pallas as pl
from jax.experimental.pallas import tpu as pltpu


# ----------------------------------------------------------------------------
# divergence functions
# ----------------------------------------------------------------------------
def _pow(x, p):
    """Power matching torch.pow for integral float exponents (sign-aware)."""
    ip = round(p)
    if abs(p - ip) < 1e-9:
        return x ** int(ip)           # integer_pow: exact, handles negative base
    return x ** p


def _get_funcs(div: str, a: float, eps: float):
    """Return (f_prime, f_star, fused_neg) with fused_neg = f_star o f_prime."""
    e = eps
    div = div.lower()
    if div == "kl":
        f_p = lambda u: jnp.log(u + e) + 1.0
        f_s = lambda t: jnp.exp(t - 1.0)
        fused = lambda g: g + e                               # exp(log(g+e)+1-1)
    elif div == "chi2":
        f_p = lambda u: 2.0 * (u - 1.0)
        f_s = lambda t: 0.25 * t ** 2 + t
        fused = lambda g: g * g - 1.0
    elif div == "js":
        f_p = lambda u: jnp.log(2.0) + jnp.log(u + e) - jnp.log(1.0 + u)
        f_s = lambda t: -jnp.log(2.0 - jnp.exp(t))
        _c = math.log(2.0 * (1.0 - e))
        fused = lambda g: jnp.log1p(g) - _c
    elif div == "sh":
        f_p = lambda u: 1.0 - lax.rsqrt(u + e)
        f_s = lambda t: t / (1.0 - t + e)
        def fused(g):
            r = lax.rsqrt(g + e)
            return (1.0 - r) / (r + e)
    elif div == "tsallis":
        # TODO(synk): mirrors torch composition; NaN for alphas where a/(a-1) is
        # a non-integer power of a negative base.
        p1 = a - 1.0
        p2 = a / (a - 1.0)
        f_p = lambda u: -(a / p1) * _pow(u, p1)
        f_s = lambda t: _pow(p1 * t / a, p2)
        fused = lambda g: _pow(-_pow(g, p1), p2)
    elif div == "vlc":
        f_p = lambda u: 1.0 - 4.0 / (u + 1.0) ** 2
        f_s = lambda t: 4.0 - t - 4.0 * jnp.sqrt(1.0 - t + e)
        def fused(g):
            q = 4.0 / ((g + 1.0) * (g + 1.0))
            return 3.0 + q - 4.0 * jnp.sqrt(q + e)
    else:
        raise ValueError(f"Unknown divergence type: {div}")
    return f_p, f_s, fused


def _normalize(x):
    n = jnp.sqrt(jnp.sum(x * x, axis=1, keepdims=True))
    return x / jnp.maximum(n, 1e-12)      # matches F.normalize(dim=1, eps=1e-12)


def _neg_elem(gram_vals, inv_sigma2, fused_neg, compute_dtype):
    """Same per-element negative-term arithmetic as the kernel (for corrections)."""
    arg = jnp.minimum(gram_vals - 1.0, 0.0) * inv_sigma2
    g = jnp.exp(arg.astype(compute_dtype))
    return fused_neg(g).astype(jnp.float32)


def _transcendental_dtype():
    """bf16 EUP/VPU only on v6e / v7x; keep f32 elsewhere (v5e has no bf16 VPU/EUP)."""
    try:
        kind = jax.devices()[0].device_kind.lower()
    except Exception:
        return jnp.float32
    if ("v6" in kind) or ("v7" in kind):
        return jnp.bfloat16
    return jnp.float32


# ----------------------------------------------------------------------------
# kernel: raw negative-term row partials (lane-dense accumulator)
# ----------------------------------------------------------------------------
def _fmicl_neg_kernel(z_row_ref, z_col_ref, out_ref, *,
                      inv_sigma2, fused_neg, compute_dtype, block_n):
    j = pl.program_id(1)

    zr = z_row_ref[...]                     # (block_m, D) bf16, already unit-norm
    zc = z_col_ref[...]                     # (block_n, D) bf16, already unit-norm

    # Gram tile on the MXU: contract D of both operands, f32 accumulation.
    gram = lax.dot_general(zr, zc,
                           dimension_numbers=(((1,), (1,)), ((), ())),
                           preferred_element_type=jnp.float32)  # (bm, bn) f32

    # unit-norm rows: ||zi - zj||^2 = 2 - 2*gram; clamp folded into the exp arg.
    arg = jnp.minimum(gram - 1.0, 0.0) * inv_sigma2
    g = jnp.exp(arg.astype(compute_dtype))            # EUP; bf16 on v6e/v7x
    tile = fused_neg(g).astype(jnp.float32)           # f_star(f_prime(g)), fused

    # Lane-dense partial reduction: fold block_n into 128 lanes with VPU adds;
    # the cross-lane reduce / narrow store happens outside the kernel.
    acc = tile[:, 0:128]
    for c in range(128, block_n, 128):                # static, unrolled at trace
        acc = acc + tile[:, c:c + 128]

    @pl.when(j == 0)
    def _init():
        out_ref[...] = acc

    @pl.when(j > 0)
    def _accum():
        out_ref[...] += acc


# ----------------------------------------------------------------------------
# wrapper
# ----------------------------------------------------------------------------
def _round_up(x, m):
    return ((x + m - 1) // m) * m


def fmicl_loss(z_list, *, div_type="kl", sigma=1.0, alpha=1.5,
               tsallis_alpha=1.5, eps=1e-8, block_m=None, block_n=None,
               compute_dtype=None):
    """JAX/Pallas equivalent of FMICLLoss.forward(z_list) -> (loss, 0.0)."""
    z1, z2 = z_list[1], z_list[2]
    n, d = z1.shape
    if n < 2:
        raise ValueError("f-MICL loss requires at least 2 samples (N >= 2).")

    f_prime, _, fused_neg = _get_funcs(div_type, tsallis_alpha, eps)
    inv_sigma2 = 1.0 / float(sigma) ** 2
    if compute_dtype is None:
        compute_dtype = _transcendental_dtype()

    # ---- positive (Gaussian) term: O(N*D), plain XLA (out of the Pallas loop) ----
    z1n = _normalize(z1.astype(jnp.float32))
    z2n = _normalize(z2.astype(jnp.float32))
    d_pos = jnp.sum((z1n - z2n) ** 2, axis=1)
    pos_term = jnp.mean(f_prime(jnp.exp(-d_pos * (0.5 * inv_sigma2))))

    # ---- tiling ----------------------------------------------------------------
    if block_n is None:
        # large column tile: fewer grid steps / accumulator RMWs, wide MXU N;
        # VMEM use stays small (f32 tile at 256x1024 is ~1 MiB).
        block_n = min(1024, _round_up(n, 128))
    if block_m is None:
        bm = 256
        # prefer >= 2 row blocks (both v7x TensorCores get work on the "parallel"
        # axis) and block_m | block_n (keeps padding bounded by block_n).
        while bm > 8 and (bm * 2 > n or block_n % bm != 0):
            bm //= 2
        block_m = bm
    if block_m % 8 != 0 or block_n % 128 != 0:
        raise ValueError("block_m must be a multiple of 8 and block_n of 128.")

    lcm = block_m * block_n // math.gcd(block_m, block_n)
    n_pad = _round_up(n, lcm)              # pad instead of falling back to block=N

    # Pre-normalized bf16 MXU operand; padded rows are exactly zero => gram == 0.
    z1b = z1n.astype(jnp.bfloat16)
    if n_pad > n:
        z1b = jnp.pad(z1b, ((0, n_pad - n), (0, 0)))

    kernel = functools.partial(
        _fmicl_neg_kernel, inv_sigma2=inv_sigma2, fused_neg=fused_neg,
        compute_dtype=compute_dtype, block_n=block_n)

    grid = (n_pad // block_m, n_pad // block_n)
    row_partials = pl.pallas_call(
        kernel,
        out_shape=jax.ShapeDtypeStruct((n_pad, 128), jnp.float32),
        grid=grid,
        in_specs=[
            pl.BlockSpec((block_m, d), lambda i, j: (i, 0)),   # row block
            pl.BlockSpec((block_n, d), lambda i, j: (j, 0)),   # column block
        ],
        out_specs=pl.BlockSpec((block_m, 128), lambda i, j: (i, 0)),
        compiler_params=pltpu.CompilerParams(
            dimension_semantics=("parallel", "arbitrary")),
        cost_estimate=pl.CostEstimate(
            flops=2 * n_pad * n_pad * d + 8 * n_pad * n_pad,
            transcendentals=n_pad * n_pad,
            bytes_accessed=2 * n_pad * d * (grid[0] + grid[1]) + n_pad * 128 * 4),
    )(z1b, z1b)

    # Includes padded pairs and the real diagonal; both removed exactly below.
    neg_full = jnp.sum(row_partials)

    # Padded pairs: one operand is a zero row => gram == 0, a constant identical
    # to the kernel's compute path.  Real diagonal: true bf16 gram_ii = ||z_bf16||^2
    # (does NOT assume gram_ii == 1 exactly).
    pad_pairs = float(n_pad * n_pad - n * n)
    pad_val = _neg_elem(jnp.float32(0.0), inv_sigma2, fused_neg, compute_dtype)
    zb32 = z1b[:n].astype(jnp.float32)
    diag_gram = jnp.sum(zb32 * zb32, axis=1)
    diag_sum = jnp.sum(_neg_elem(diag_gram, inv_sigma2, fused_neg, compute_dtype))

    neg_sum = neg_full - pad_pairs * pad_val - diag_sum
    loss = -pos_term + (alpha / (n * (n - 1.0))) * neg_sum
    return loss, 0.0


# ----------------------------------------------------------------------------
# pure-jnp reference (sanity check only)
# ----------------------------------------------------------------------------
def _reference_loss(z1, z2, *, div_type="kl", sigma=1.0, alpha=1.5,
                    tsallis_alpha=1.5, eps=1e-8):
    f_p, f_s, _ = _get_funcs(div_type, tsallis_alpha, eps)
    z1 = _normalize(z1.astype(jnp.float32))
    z2 = _normalize(z2.astype(jnp.float32))
    n = z1.shape[0]
    d_pos = jnp.sum((z1 - z2) ** 2, axis=1)
    s_pos = f_p(jnp.exp(-d_pos / (2.0 * sigma ** 2)))
    d2 = jnp.sum((z1[:, None, :] - z1[None, :, :]) ** 2, axis=-1)
    g_neg = jnp.exp(-d2 / (2.0 * sigma ** 2))
    star = f_s(f_p(g_neg))
    mask = ~jnp.eye(n, dtype=bool)
    return -jnp.mean(s_pos) + alpha * jnp.sum(jnp.where(mask, star, 0.0)) / (n * (n - 1))


if __name__ == "__main__":
    key = jax.random.PRNGKey(0)
    k0, k1, k2 = jax.random.split(key, 3)
    N, D = 256, 32
    z0 = jax.random.normal(k0, (N, D), dtype=jnp.float32)   # index 0 unused (as in torch)
    z1 = jax.random.normal(k1, (N, D), dtype=jnp.float32)
    z2 = jax.random.normal(k2, (N, D), dtype=jnp.float32)

    ref = _reference_loss(z1, z2)

    # 1) default tiling (block_m=128, block_n=256 -> grid (2, 1))
    loss, _zero = fmicl_loss([z0, z1, z2])
    jax.block_until_ready(loss)
    if not jnp.allclose(loss, ref, rtol=3e-2, atol=1e-2):
        raise AssertionError(f"default-tile mismatch: kernel={float(loss)} ref={float(ref)}")

    # 2) explicit small tiles -> real (4 x 2) grid exercising in-kernel accumulation
    loss2, _ = fmicl_loss([z0, z1, z2], block_m=64, block_n=128)
    jax.block_until_ready(loss2)
    if not jnp.allclose(loss2, ref, rtol=3e-2, atol=1e-2):
        raise AssertionError(f"small-tile mismatch: kernel={float(loss2)} ref={float(ref)}")

    # 3) non-divisible N -> exercises the zero-row padding + exact pad/diag removal
    M = 200
    loss3, _ = fmicl_loss([z0[:M], z1[:M], z2[:M]])
    jax.block_until_ready(loss3)
    ref3 = _reference_loss(z1[:M], z2[:M])
    if not jnp.allclose(loss3, ref3, rtol=3e-2, atol=1e-2):
        raise AssertionError(f"padded-N mismatch: kernel={float(loss3)} ref={float(ref3)}")

    print("KERNEL_OK")
</pallas_src>

<mosaic_0001>
module attributes {stable_mosaic.version = 11 : i64} {
  func.func @_fmicl_neg_kernel(%arg0: i32, %arg1: i32, %arg2: memref<128x32xbf16, #tpu.memory_space<vmem>>, %arg3: memref<256x32xbf16, #tpu.memory_space<vmem>>, %arg4: memref<128x128xf32, #tpu.memory_space<vmem>>) attributes {dimension_semantics = [#tpu.dimension_semantics<parallel>, #tpu.dimension_semantics<arbitrary>], iteration_bounds = array<i64: 2, 1>, scalar_prefetch = 0 : i64, scratch_operands = 0 : i64, tpu.core_type = #tpu.core_type<tc>, window_params = [{transform_indices = @transform_0, window_bounds = array<i64: 128, 32>}, {transform_indices = @transform_1, window_bounds = array<i64: 256, 32>}, {transform_indices = @transform_2, window_bounds = array<i64: 128, 128>}]} {
    %c0 = arith.constant 0 : index
    %c0_0 = arith.constant 0 : index
    %0 = vector.load %arg2[%c0, %c0_0] : memref<128x32xbf16, #tpu.memory_space<vmem>>, vector<128x32xbf16>
    %c0_1 = arith.constant 0 : index
    %c0_2 = arith.constant 0 : index
    %1 = vector.load %arg3[%c0_1, %c0_2] : memref<256x32xbf16, #tpu.memory_space<vmem>>, vector<256x32xbf16>
    %cst = arith.constant dense<0.000000e+00> : vector<128x256xf32>
    %2 = tpu.matmul %0, %1, %cst {dimension_numbers = #tpu.dot_dimension_numbers<[1], [1], [0], [0], [0, 0, 1, 0], [], []>} : vector<128x32xbf16>, vector<256x32xbf16>, vector<128x256xf32> -> vector<128x256xf32>
    %cst_3 = arith.constant 1.000000e+00 : f32
    %3 = vector.broadcast %cst_3 : f32 to vector<128x256xf32>
    %4 = arith.subf %2, %3 : vector<128x256xf32>
    %cst_4 = arith.constant 0.000000e+00 : f32
    %5 = vector.broadcast %cst_4 : f32 to vector<128x256xf32>
    %6 = arith.minimumf %4, %5 : vector<128x256xf32>
    %cst_5 = arith.constant 1.000000e+00 : f32
    %7 = vector.broadcast %cst_5 : f32 to vector<128x256xf32>
    %8 = arith.mulf %6, %7 : vector<128x256xf32>
    %9 = math.exp %8 : vector<128x256xf32>
    %cst_6 = arith.constant 9.99999993E-9 : f32
    %10 = vector.broadcast %cst_6 : f32 to vector<128x256xf32>
    %11 = arith.addf %9, %10 : vector<128x256xf32>
    %12 = vector.extract_strided_slice %11 {offsets = [0, 0], sizes = [128, 128], strides = [1, 1]} : vector<128x256xf32> to vector<128x128xf32>
    %13 = vector.extract_strided_slice %11 {offsets = [0, 128], sizes = [128, 128], strides = [1, 1]} : vector<128x256xf32> to vector<128x128xf32>
    %14 = arith.addf %12, %13 : vector<128x128xf32>
    %c0_i32 = arith.constant 0 : i32
    %15 = arith.cmpi eq, %arg1, %c0_i32 : i32
    %16 = arith.extui %15 : i1 to i32
    %c0_i32_7 = arith.constant 0 : i32
    %17 = arith.cmpi ne, %16, %c0_i32_7 : i32
    scf.if %17 {
      %c0_10 = arith.constant 0 : index
      %c0_11 = arith.constant 0 : index
      %21 = vector.load %arg4[%c0_10, %c0_11] : memref<128x128xf32, #tpu.memory_space<vmem>>, vector<128x128xf32>
      tpu.vector_store %arg4[%c0_10, %c0_11], %14 {strides = array<i32>} : memref<128x128xf32, #tpu.memory_space<vmem>>, vector<128x128xf32>,
    } else {
    }
    %c0_i32_8 = arith.constant 0 : i32
    %18 = arith.cmpi sgt, %arg1, %c0_i32_8 : i32
    %19 = arith.extui %18 : i1 to i32
    %c0_i32_9 = arith.constant 0 : i32
    %20 = arith.cmpi ne, %19, %c0_i32_9 : i32
    scf.if %20 {
      %c0_10 = arith.constant 0 : index
      %c0_11 = arith.constant 0 : index
      %21 = vector.load %arg4[%c0_10, %c0_11] : memref<128x128xf32, #tpu.memory_space<vmem>>, vector<128x128xf32>
      %22 = arith.addf %21, %14 : vector<128x128xf32>
      %c0_12 = arith.constant 0 : index
      %c0_13 = arith.constant 0 : index
      %23 = vector.load %arg4[%c0_12, %c0_13] : memref<128x128xf32, #tpu.memory_space<vmem>>, vector<128x128xf32>
      tpu.vector_store %arg4[%c0_12, %c0_13], %22 {strides = array<i32>} : memref<128x128xf32, #tpu.memory_space<vmem>>, vector<128x128xf32>,
    } else {
    }
    return
  }
  func.func @transform_0(%arg0: i32, %arg1: i32) -> (i32, i32) {
    %c0_i32 = arith.constant 0 : i32
    %c0_i32_0 = arith.constant 0 : i32
    return %arg0, %c0_i32 : i32, i32
  }
  func.func @transform_1(%arg0: i32, %arg1: i32) -> (i32, i32) {
    %c0_i32 = arith.constant 0 : i32
    %c0_i32_0 = arith.constant 0 : i32
    return %arg1, %c0_i32 : i32, i32
  }
  func.func @transform_2(%arg0: i32, %arg1: i32) -> (i32, i32) {
    %c0_i32 = arith.constant 0 : i32
    %c0_i32_0 = arith.constant 0 : i32
    return %arg0, %c0_i32 : i32, i32
  }
}

</mosaic_0001>

<llo_original>
// kernel: tpu_custom_call.1
$region0: #{tpu_custom_call.1}
  #allocation0 [shape = 'u32[]', space=smem, size = 0x4, offset = 0x4, fixed_abs, tag = 'smem constant byte address 0x4 - core index']
  #allocation1 [shape = 'u32[72,128]{1,0:T(1,128)}', space=vmem, size = 0x9000, scoped, tag = 'internal scratch']
  %s0 = inlined_call_operand.vmem [shape: bf16[256,32], index: 0, kind: input, shape index: {}]
  %s1 = inlined_call_operand.vmem [shape: bf16[256,32], index: 1, kind: input, shape index: {}]
  %s2 = inlined_call_operand.hbm [shape: f32[256,128], index: 2, kind: output, shape index: {}]
  %s3 = sld [smem:[#allocation0]]
  $region49: #{tpu_custom_call.1} parent=0
    _
  %s5 = ssub.s32 1, %s3
  %s6 = scalar_select 0, %s5, %s3
  $region1: #{tpu_custom_call.1} parent=0
    #allocation2 [shape = 'u8[131072]{0}', space=vmem, size = 0x20000, scoped, tag = 'output window, operand 0']
    #allocation3 [shape = 's32[2]{0}', space=sflag, size = 0x8, scoped, tag = 'scoped memory for tpu_custom_call.1']
    %7 = vsyncpa [#allocation3], 0
    %s8 = scalar_lea.sflag [#allocation3], 1
    %9 = vsyncpa %s8, 0
    loop: start=0, step=1, limit=4
    $region2: #{tpu_custom_call.1} parent=1 // loop_pre_header
      _
    $region3: #{tpu_custom_call.1} parent=1 // loop_header
      %s11 = sphi 0, %s15
      %p12 = scmp.ge.s32.totalorder %s11, 4
      %s18 = sphi 0, %s30
      %s19 = sphi 0, %s26
      %s20 = sphi 0, %s18
      %s21 = sphi 0, %s19
      %s22 = sphi 0, %s20
      %s23 = sphi 0, %s21
      %s33 = sphi 0, %s35
      %s36 = sphi 0, %s33
      %s37 = sphi 0, %s36
      %s53 = sphi 0, %s37
      %s59 = sphi 0, %s61
      %s62 = sphi 0, %s59
      %s63 = sphi 0, %s62
      %s79 = sphi 0, %s63
      %s85 = sphi 0, %s87
      %s88 = sphi 0, %s85
      %s89 = sphi 0, %s88
      %s105 = sphi 0, %s89
    $region4: #{tpu_custom_call.1} parent=1 // loop_header_branch
      %14 = sbr.rel (%p12) target = $region8
    $region5: #{tpu_custom_call.1} parent=1 // loop_body
      %s16 = ssub.s32 %s11, 1
      %s17 = ssub.s32 %s11, 2
      %s24 = sadd.s32 1, %s19
      %p25 = scmp.ge.s32.totalorder %s24, 1
      %s26 = scalar_select %p25, 0, %s24
      %s27 = sadd.s32 1, %s18
      %s28 = scalar_select %p25, %s27, %s18
      %p29 = scmp.ge.s32.totalorder %s28, 2
      %s30 = scalar_select %p29, 0, %s28
      %s31 = ssub.s32 %s18, %s30
      %p32 = scmp.eq.s32.totalorder %s31, 0
      %s34 = sadd.s32 %s33, 1
      %s35 = scalar_select %p32, %s33, %s34
      %p38 = pneg %p32
      %p39 = scmp.eq.s32.totalorder %s11, 1
      %p40 = por %p38, %p39
      %p41 = scmp.ne.s32.totalorder %s33, %s36
      %p42 = scmp.eq.s32.totalorder %s11, 0
      %p43 = por %p41, %p42
      %p44 = scmp.ne.s32.totalorder %s33, %s36
      %p45 = scmp.eq.s32.totalorder %s16, 1
      %p46 = por %p44, %p45
      %p47 = scmp.ne.s32.totalorder %s36, %s37
      %p48 = scmp.eq.s32.totalorder %s16, 0
      %p49 = por %p47, %p48
      %p50 = scmp.ne.s32.totalorder %s36, %s37
      %p51 = scmp.eq.s32.totalorder %s17, 1
      %p52 = por %p50, %p51
      %p54 = scmp.ne.s32.totalorder %s37, %s53
      %p55 = scmp.eq.s32.totalorder %s17, 0
      %p56 = por %p54, %p55
      %s57 = ssub.s32 %s19, %s26
      %p58 = scmp.eq.s32.totalorder %s57, 0
      %s60 = sadd.s32 %s59, 1
      %s61 = scalar_select %p58, %s59, %s60
      %p64 = pneg %p58
      %p65 = scmp.eq.s32.totalorder %s11, 1
      %p66 = por %p64, %p65
      %p67 = scmp.ne.s32.totalorder %s59, %s62
      %p68 = scmp.eq.s32.totalorder %s11, 0
      %p69 = por %p67, %p68
      %p70 = scmp.ne.s32.totalorder %s59, %s62
      %p71 = scmp.eq.s32.totalorder %s16, 1
      %p72 = por %p70, %p71
      %p73 = scmp.ne.s32.totalorder %s62, %s63
      %p74 = scmp.eq.s32.totalorder %s16, 0
      %p75 = por %p73, %p74
      %p76 = scmp.ne.s32.totalorder %s62, %s63
      %p77 = scmp.eq.s32.totalorder %s17, 1
      %p78 = por %p76, %p77
      %p80 = scmp.ne.s32.totalorder %s63, %s79
      %p81 = scmp.eq.s32.totalorder %s17, 0
      %p82 = por %p80, %p81
      %s83 = ssub.s32 %s18, %s30
      %p84 = scmp.eq.s32.totalorder %s83, 0
      %s86 = sadd.s32 %s85, 1
      %s87 = scalar_select %p84, %s85, %s86
      %p90 = pneg %p84
      %p91 = scmp.eq.s32.totalorder %s11, 1
      %p92 = por %p90, %p91
      %p93 = scmp.ne.s32.totalorder %s85, %s88
      %p94 = scmp.eq.s32.totalorder %s11, 0
      %p95 = por %p93, %p94
      %p96 = scmp.ne.s32.totalorder %s85, %s88
      %p97 = scmp.eq.s32.totalorder %s16, 1
      %p98 = por %p96, %p97
      %p99 = scmp.ne.s32.totalorder %s88, %s89
      %p100 = scmp.eq.s32.totalorder %s16, 0
      %p101 = por %p99, %p100
      %p102 = scmp.ne.s32.totalorder %s88, %s89
      %p103 = scmp.eq.s32.totalorder %s17, 1
      %p104 = por %p102, %p103
      %p106 = scmp.ne.s32.totalorder %s89, %s105
      %p107 = scmp.eq.s32.totalorder %s17, 0
      %p108 = por %p106, %p107
      %p109 = scmp.le.s32.totalorder 1, %s11
      %p110 = scmp.lt.s32.totalorder %s11, 3
      %p111 = pnand %p109, %p110
      %p112 = pneg %p111
      // Predicated region
      $region9: #{tpu_custom_call.1} parent=5 // pred_check
        _
      $region10: #{tpu_custom_call.1} parent=5 // pred_check_branch
        %114 = sbr.rel (%p111) target = $region12
      $region11: #{tpu_custom_call.1} parent=5 // pred_region
        %s115 = ssub.s32 %s11, 1
        // Predicated region
        $region13: #{tpu_custom_call.1} parent=11 // pred_check
          %p116 = pneg %p75
        $region14: #{tpu_custom_call.1} parent=11 // pred_check_branch
          %118 = sbr.rel (%p116) target = $region16
        $region15: #{tpu_custom_call.1} parent=11 // pred_region
          %s119 = smul.u32 32, %s21
          %p120 = scmp.lt.s32.totalorder %s119, 31
          %s121 = scalar_select %p120, %s119, 31
          %s122 = smul.addr %s121, 4
          %s123 = scalar_lea.vmem %s1, %s122
          %s124 = smul.u32 32, %s21
        $region16: #{tpu_custom_call.1} parent=11 // pred_fallthru
          _
      $region12: #{tpu_custom_call.1} parent=5 // pred_fallthru
        _
      %p125 = scmp.lt.s32.totalorder %s11, 2
      // Predicated region
      $region17: #{tpu_custom_call.1} parent=5 // pred_check
        %p126 = pneg %p125
      $region18: #{tpu_custom_call.1} parent=5 // pred_check_branch
        %128 = sbr.rel (%p126) target = $region20
      $region19: #{tpu_custom_call.1} parent=5 // pred_region
        // Predicated region
        $region21: #{tpu_custom_call.1} parent=19 // pred_check
          %p129 = pneg %p43
        $region22: #{tpu_custom_call.1} parent=19 // pred_check_branch
          %131 = sbr.rel (%p129) target = $region24
        $region23: #{tpu_custom_call.1} parent=19 // pred_region
          %s132 = smul.u32 16, %s18
          %p133 = scmp.lt.s32.totalorder %s132, 31
          %s134 = scalar_select %p133, %s132, 31
          %s135 = smul.addr %s134, 4
          %s136 = scalar_lea.vmem %s0, %s135
          %s137 = smul.u32 16, %s18
        $region24: #{tpu_custom_call.1} parent=19 // pred_fallthru
          _
      $region20: #{tpu_custom_call.1} parent=5 // pred_fallthru
        _
      %p138 = scmp.le.s32.totalorder 1, %s11
      %p139 = scmp.lt.s32.totalorder %s11, 3
      %p140 = pnand %p138, %p139
      %p141 = pneg %p140
      // Predicated region
      $region25: #{tpu_custom_call.1} parent=5 // pred_check
        _
      $region26: #{tpu_custom_call.1} parent=5 // pred_check_branch
        %143 = sbr.rel (%p140) target = $region28
      $region27: #{tpu_custom_call.1} parent=5 // pred_region
        %s144 = ssub.s32 %s11, 1
        %s145 = smul.u32 16, %s20
        %p146 = scmp.lt.s32.totalorder %s145, 31
        %s147 = scalar_select %p146, %s145, 31
        %s148 = smul.addr %s147, 4
        %s149 = scalar_lea.vmem %s0, %s148
        %p150 = pneg %p49
        %p151 = pneg %p46
        %s152 = smul.u32 32, %s21
        %p153 = scmp.lt.s32.totalorder %s152, 31
        %s154 = scalar_select %p153, %s152, 31
        %s155 = smul.addr %s154, 4
        %s156 = scalar_lea.vmem %s1, %s155
        %p157 = pneg %p75
        %p158 = pneg %p72
        %p159 = pneg %p101
        %p160 = pneg %p98
        %s161 = sand.u32 %s88, 1
        %s162 = scalar_lea.sflag [#allocation3], %s161
        %s163 = sand.u32 %s88, 1
        %s164 = smul.addr %s163, 128
        %s165 = scalar_lea.vmem [#allocation2], %s164
        %s166 = smul.u32 16, %s20
        %p167 = scmp.lt.s32.totalorder %s166, 31
        %s168 = scalar_select %p167, %s166, 31
        %s169 = smul.addr %s168, 4
        %s170 = scalar_lea.vmem %s0, %s169
        %s171 = smul.u32 16, %s20
        %s172 = smul.u32 32, %s21
        %p173 = scmp.lt.s32.totalorder %s172, 31
        %s174 = scalar_select %p173, %s172, 31
        %s175 = smul.addr %s174, 4
        %s176 = scalar_lea.vmem %s1, %s175
        %s177 = smul.u32 32, %s21
        %s178 = smul.u32 16, %s20
        %v179 = vld [vmem:[%s170] sm:$0xf]
        %v180 = vld [vmem:[%s170 + $0x4] sm:$0xf]
        %v181 = vld [vmem:[%s170 + $0x8] sm:$0xf]
        %v182 = vld [vmem:[%s170 + $0xc] sm:$0xf]
        %v183 = vld [vmem:[%s170 + $0x10] sm:$0xf]
        %v184 = vld [vmem:[%s170 + $0x14] sm:$0xf]
        %v185 = vld [vmem:[%s170 + $0x18] sm:$0xf]
        %v186 = vld [vmem:[%s170 + $0x1c] sm:$0xf]
        %v187 = vld [vmem:[%s170 + $0x20] sm:$0xf]
        %v188 = vld [vmem:[%s170 + $0x24] sm:$0xf]
        %v189 = vld [vmem:[%s170 + $0x28] sm:$0xf]
        %v190 = vld [vmem:[%s170 + $0x2c] sm:$0xf]
        %v191 = vld [vmem:[%s170 + $0x30] sm:$0xf]
        %v192 = vld [vmem:[%s170 + $0x34] sm:$0xf]
        %v193 = vld [vmem:[%s170 + $0x38] sm:$0xf]
        %v194 = vld [vmem:[%s170 + $0x3c] sm:$0xf]
        %v195 = vld [vmem:[%s176] sm:$0xf]
        %v196 = vld [vmem:[%s176 + $0x4] sm:$0xf]
        %v197 = vld [vmem:[%s176 + $0x8] sm:$0xf]
        %v198 = vld [vmem:[%s176 + $0xc] sm:$0xf]
        %v199 = vld [vmem:[%s176 + $0x10] sm:$0xf]
        %v200 = vld [vmem:[%s176 + $0x14] sm:$0xf]
        %v201 = vld [vmem:[%s176 + $0x18] sm:$0xf]
        %v202 = vld [vmem:[%s176 + $0x1c] sm:$0xf]
        %v203 = vld [vmem:[%s176 + $0x20] sm:$0xf]
        %v204 = vld [vmem:[%s176 + $0x24] sm:$0xf]
        %v205 = vld [vmem:[%s176 + $0x28] sm:$0xf]
        %v206 = vld [vmem:[%s176 + $0x2c] sm:$0xf]
        %v207 = vld [vmem:[%s176 + $0x30] sm:$0xf]
        %v208 = vld [vmem:[%s176 + $0x34] sm:$0xf]
        %v209 = vld [vmem:[%s176 + $0x38] sm:$0xf]
        %v210 = vld [vmem:[%s176 + $0x3c] sm:$0xf]
        %v211 = vld [vmem:[%s176 + $0x40] sm:$0xf]
        %v212 = vld [vmem:[%s176 + $0x44] sm:$0xf]
        %v213 = vld [vmem:[%s176 + $0x48] sm:$0xf]
        %v214 = vld [vmem:[%s176 + $0x4c] sm:$0xf]
        %v215 = vld [vmem:[%s176 + $0x50] sm:$0xf]
        %v216 = vld [vmem:[%s176 + $0x54] sm:$0xf]
        %v217 = vld [vmem:[%s176 + $0x58] sm:$0xf]
        %v218 = vld [vmem:[%s176 + $0x5c] sm:$0xf]
        %v219 = vld [vmem:[%s176 + $0x60] sm:$0xf]
        %v220 = vld [vmem:[%s176 + $0x64] sm:$0xf]
        %v221 = vld [vmem:[%s176 + $0x68] sm:$0xf]
        %v222 = vld [vmem:[%s176 + $0x6c] sm:$0xf]
        %v223 = vld [vmem:[%s176 + $0x70] sm:$0xf]
        %v224 = vld [vmem:[%s176 + $0x74] sm:$0xf]
        %v225 = vld [vmem:[%s176 + $0x78] sm:$0xf]
        %v226 = vld [vmem:[%s176 + $0x7c] sm:$0xf]
        %v243 = vunpack.c.l.b16 %v179
        %v244 = vunpack.c.l.b16 %v180
        %v245 = vunpack.c.l.b16 %v181
        %v246 = vunpack.c.l.b16 %v182
        %v247 = vunpack.c.l.b16 %v183
        %v248 = vunpack.c.l.b16 %v184
        %v249 = vunpack.c.l.b16 %v185
        %v250 = vunpack.c.l.b16 %v186
        %v251 = vunpack.c.l.b16 %v187
        %v252 = vunpack.c.l.b16 %v188
        %v253 = vunpack.c.l.b16 %v189
        %v254 = vunpack.c.l.b16 %v190
        %v255 = vunpack.c.l.b16 %v191
        %v256 = vunpack.c.l.b16 %v192
        %v257 = vunpack.c.l.b16 %v193
        %v258 = vunpack.c.l.b16 %v194
        %v259 = vpack.c.b16 %v244, %v243
        %v260 = vpack.c.b16 %v246, %v245
        %v261 = vpack.c.b16 %v248, %v247
        %v262 = vpack.c.b16 %v250, %v249
        %v263 = vpack.c.b16 %v252, %v251
        %v264 = vpack.c.b16 %v254, %v253
        %v265 = vpack.c.b16 %v256, %v255
        %v266 = vpack.c.b16 %v258, %v257
        %v299 = vunpack.c.l.b16 %v195
        %v300 = vunpack.c.l.b16 %v196
        %v301 = vunpack.c.l.b16 %v197
        %v302 = vunpack.c.l.b16 %v198
        %v303 = vunpack.c.l.b16 %v199
        %v304 = vunpack.c.l.b16 %v200
        %v305 = vunpack.c.l.b16 %v201
        %v306 = vunpack.c.l.b16 %v202
        %v307 = vunpack.c.l.b16 %v203
        %v308 = vunpack.c.l.b16 %v204
        %v309 = vunpack.c.l.b16 %v205
        %v310 = vunpack.c.l.b16 %v206
        %v311 = vunpack.c.l.b16 %v207
        %v312 = vunpack.c.l.b16 %v208
        %v313 = vunpack.c.l.b16 %v209
        %v314 = vunpack.c.l.b16 %v210
        %v315 = vunpack.c.l.b16 %v211
        %v316 = vunpack.c.l.b16 %v212
        %v317 = vunpack.c.l.b16 %v213
        %v318 = vunpack.c.l.b16 %v214
        %v319 = vunpack.c.l.b16 %v215
        %v320 = vunpack.c.l.b16 %v216
        %v321 = vunpack.c.l.b16 %v217
        %v322 = vunpack.c.l.b16 %v218
        %v323 = vunpack.c.l.b16 %v219
        %v324 = vunpack.c.l.b16 %v220
        %v325 = vunpack.c.l.b16 %v221
        %v326 = vunpack.c.l.b16 %v222
        %v327 = vunpack.c.l.b16 %v223
        %v328 = vunpack.c.l.b16 %v224
        %v329 = vunpack.c.l.b16 %v225
        %v330 = vunpack.c.l.b16 %v226
        %v331 = vpack.c.b16 %v300, %v299
        %v332 = vpack.c.b16 %v302, %v301
        %v333 = vpack.c.b16 %v304, %v303
        %v334 = vpack.c.b16 %v306, %v305
        %v335 = vpack.c.b16 %v308, %v307
        %v336 = vpack.c.b16 %v310, %v309
        %v337 = vpack.c.b16 %v312, %v311
        %v338 = vpack.c.b16 %v314, %v313
        %v339 = vpack.c.b16 %v316, %v315
        %v340 = vpack.c.b16 %v318, %v317
        %v341 = vpack.c.b16 %v320, %v319
        %v342 = vpack.c.b16 %v322, %v321
        %v343 = vpack.c.b16 %v324, %v323
        %v344 = vpack.c.b16 %v326, %v325
        %v345 = vpack.c.b16 %v328, %v327
        %v346 = vpack.c.b16 %v330, %v329
        %vm347 = vcmask 261120
        %v349 = vsel %vm347, %v259, 0
        %v352 = vsel %vm347, %v260, 0
        %v355 = vsel %vm347, %v261, 0
        %v358 = vsel %vm347, %v262, 0
        %v361 = vsel %vm347, %v263, 0
        %v364 = vsel %vm347, %v264, 0
        %v367 = vsel %vm347, %v265, 0
        %v370 = vsel %vm347, %v266, 0
        %v373 = vsel %vm347, %v331, 0
        %v376 = vsel %vm347, %v332, 0
        %v379 = vsel %vm347, %v333, 0
        %v382 = vsel %vm347, %v334, 0
        %v385 = vsel %vm347, %v335, 0
        %v388 = vsel %vm347, %v336, 0
        %v391 = vsel %vm347, %v337, 0
        %v394 = vsel %vm347, %v338, 0
        %v397 = vsel %vm347, %v339, 0
        %v400 = vsel %vm347, %v340, 0
        %v403 = vsel %vm347, %v341, 0
        %v406 = vsel %vm347, %v342, 0
        %v409 = vsel %vm347, %v343, 0
        %v412 = vsel %vm347, %v344, 0
        %v415 = vsel %vm347, %v345, 0
        %v418 = vsel %vm347, %v346, 0
        %420 = vmatpush.bf16.xpose.msra.mxu0 %v394
        %421 = vmatpush.bf16.xpose.msra.mxu0 %v391
        %422 = vmatpush.bf16.xpose.msra.mxu0 %v388
        %423 = vmatpush.bf16.xpose.msra.mxu0 %v385
        %424 = vmatpush.bf16.xpose.msra.mxu0 %v382
        %425 = vmatpush.bf16.xpose.msra.mxu0 %v379
        %426 = vmatpush.bf16.xpose.msra.mxu0 %v376
        %427 = vmatpush.bf16.xpose.msra.mxu0 %v373
        %428 = vmatmul.bf16.gmra.mxu0 %v349
        %v429 = vpop.f32.mrf.mxu0
        %v430 = vadd.f32 0.0, %v429
        %v431 = vpop.f32.mrf.mxu0
        %v432 = vadd.f32 0.0, %v431
        %433 = vmatmul.bf16.gmra.mxu0 %v352
        %v434 = vpop.f32.mrf.mxu0
        %v435 = vadd.f32 0.0, %v434
        %v436 = vpop.f32.mrf.mxu0
        %v437 = vadd.f32 0.0, %v436
        %438 = vmatmul.bf16.gmra.mxu0 %v355
        %v439 = vpop.f32.mrf.mxu0
        %v440 = vadd.f32 0.0, %v439
        %v441 = vpop.f32.mrf.mxu0
        %v442 = vadd.f32 0.0, %v441
        %443 = vmatmul.bf16.gmra.mxu0 %v358
        %v444 = vpop.f32.mrf.mxu0
        %v445 = vadd.f32 0.0, %v444
        %v446 = vpop.f32.mrf.mxu0
        %v447 = vadd.f32 0.0, %v446
        %448 = vmatmul.bf16.gmra.mxu0 %v361
        %v449 = vpop.f32.mrf.mxu0
        %v450 = vadd.f32 0.0, %v449
        %v451 = vpop.f32.mrf.mxu0
        %v452 = vadd.f32 0.0, %v451
        %453 = vmatmul.bf16.gmra.mxu0 %v364
        %v454 = vpop.f32.mrf.mxu0
        %v455 = vadd.f32 0.0, %v454
        %v456 = vpop.f32.mrf.mxu0
        %v457 = vadd.f32 0.0, %v456
        %458 = vmatmul.bf16.gmra.mxu0 %v367
        %v459 = vpop.f32.mrf.mxu0
        %v460 = vadd.f32 0.0, %v459
        %v461 = vpop.f32.mrf.mxu0
        %v462 = vadd.f32 0.0, %v461
        %463 = vmatmul.bf16.gmra.mxu0 %v370
        %v464 = vpop.f32.mrf.mxu0
        %v465 = vadd.f32 0.0, %v464
        %v466 = vpop.f32.mrf.mxu0
        %v467 = vadd.f32 0.0, %v466
        %468 = vdwg.mxu0
        %469 = vmatpush.bf16.xpose.msra.mxu0 %v418
        %470 = vmatpush.bf16.xpose.msra.mxu0 %v415
        %471 = vmatpush.bf16.xpose.msra.mxu0 %v412
        %472 = vmatpush.bf16.xpose.msra.mxu0 %v409
        %473 = vmatpush.bf16.xpose.msra.mxu0 %v406
        %474 = vmatpush.bf16.xpose.msra.mxu0 %v403
        %475 = vmatpush.bf16.xpose.msra.mxu0 %v400
        %476 = vmatpush.bf16.xpose.msra.mxu0 %v397
        %477 = vmatmul.bf16.gmra.mxu0 %v349
        %v478 = vpop.f32.mrf.mxu0
        %v479 = vadd.f32 0.0, %v478
        %v480 = vpop.f32.mrf.mxu0
        %v481 = vadd.f32 0.0, %v480
        %482 = vmatmul.bf16.gmra.mxu0 %v352
        %v483 = vpop.f32.mrf.mxu0
        %v484 = vadd.f32 0.0, %v483
        %v485 = vpop.f32.mrf.mxu0
        %v486 = vadd.f32 0.0, %v485
        %487 = vmatmul.bf16.gmra.mxu0 %v355
        %v488 = vpop.f32.mrf.mxu0
        %v489 = vadd.f32 0.0, %v488
        %v490 = vpop.f32.mrf.mxu0
        %v491 = vadd.f32 0.0, %v490
        %492 = vmatmul.bf16.gmra.mxu0 %v358
        %v493 = vpop.f32.mrf.mxu0
        %v494 = vadd.f32 0.0, %v493
        %v495 = vpop.f32.mrf.mxu0
        %v496 = vadd.f32 0.0, %v495
        %497 = vmatmul.bf16.gmra.mxu0 %v361
        %v498 = vpop.f32.mrf.mxu0
        %v499 = vadd.f32 0.0, %v498
        %v500 = vpop.f32.mrf.mxu0
        %v501 = vadd.f32 0.0, %v500
        %502 = vmatmul.bf16.gmra.mxu0 %v364
        %v503 = vpop.f32.mrf.mxu0
        %v504 = vadd.f32 0.0, %v503
        %v505 = vpop.f32.mrf.mxu0
        %v506 = vadd.f32 0.0, %v505
        %507 = vmatmul.bf16.gmra.mxu0 %v367
        %v508 = vpop.f32.mrf.mxu0
        %v509 = vadd.f32 0.0, %v508
        %v510 = vpop.f32.mrf.mxu0
        %v511 = vadd.f32 0.0, %v510
        %512 = vmatmul.bf16.gmra.mxu0 %v370
        %v513 = vpop.f32.mrf.mxu0
        %v514 = vadd.f32 0.0, %v513
        %v515 = vpop.f32.mrf.mxu0
        %v516 = vadd.f32 0.0, %v515
        %517 = vdwg.mxu0
        %v518 = vsub.f32 %v430, 1.0
        %v519 = vsub.f32 %v479, 1.0
        %v520 = vsub.f32 %v432, 1.0
        %v521 = vsub.f32 %v481, 1.0
        %v522 = vsub.f32 %v435, 1.0
        %v523 = vsub.f32 %v484, 1.0
        %v524 = vsub.f32 %v437, 1.0
        %v525 = vsub.f32 %v486, 1.0
        %v526 = vsub.f32 %v440, 1.0
        %v527 = vsub.f32 %v489, 1.0
        %v528 = vsub.f32 %v442, 1.0
        %v529 = vsub.f32 %v491, 1.0
        %v530 = vsub.f32 %v445, 1.0
        %v531 = vsub.f32 %v494, 1.0
        %v532 = vsub.f32 %v447, 1.0
        %v533 = vsub.f32 %v496, 1.0
        %v534 = vsub.f32 %v450, 1.0
        %v535 = vsub.f32 %v499, 1.0
        %v536 = vsub.f32 %v452, 1.0
        %v537 = vsub.f32 %v501, 1.0
        %v538 = vsub.f32 %v455, 1.0
        %v539 = vsub.f32 %v504, 1.0
        %v540 = vsub.f32 %v457, 1.0
        %v541 = vsub.f32 %v506, 1.0
        %v542 = vsub.f32 %v460, 1.0
        %v543 = vsub.f32 %v509, 1.0
        %v544 = vsub.f32 %v462, 1.0
        %v545 = vsub.f32 %v511, 1.0
        %v546 = vsub.f32 %v465, 1.0
        %v547 = vsub.f32 %v514, 1.0
        %v548 = vsub.f32 %v467, 1.0
        %v549 = vsub.f32 %v516, 1.0
        %v550 = vmin.f32 %v518, 0.0
        %v551 = vmin.f32 %v519, 0.0
        %v552 = vmin.f32 %v520, 0.0
        %v553 = vmin.f32 %v521, 0.0
        %v554 = vmin.f32 %v522, 0.0
        %v555 = vmin.f32 %v523, 0.0
        %v556 = vmin.f32 %v524, 0.0
        %v557 = vmin.f32 %v525, 0.0
        %v558 = vmin.f32 %v526, 0.0
        %v559 = vmin.f32 %v527, 0.0
        %v560 = vmin.f32 %v528, 0.0
        %v561 = vmin.f32 %v529, 0.0
        %v562 = vmin.f32 %v530, 0.0
        %v563 = vmin.f32 %v531, 0.0
        %v564 = vmin.f32 %v532, 0.0
        %v565 = vmin.f32 %v533, 0.0
        %v566 = vmin.f32 %v534, 0.0
        %v567 = vmin.f32 %v535, 0.0
        %v568 = vmin.f32 %v536, 0.0
        %v569 = vmin.f32 %v537, 0.0
        %v570 = vmin.f32 %v538, 0.0
        %v571 = vmin.f32 %v539, 0.0
        %v572 = vmin.f32 %v540, 0.0
        %v573 = vmin.f32 %v541, 0.0
        %v574 = vmin.f32 %v542, 0.0
        %v575 = vmin.f32 %v543, 0.0
        %v576 = vmin.f32 %v544, 0.0
        %v577 = vmin.f32 %v545, 0.0
        %v578 = vmin.f32 %v546, 0.0
        %v579 = vmin.f32 %v547, 0.0
        %v580 = vmin.f32 %v548, 0.0
        %v581 = vmin.f32 %v549, 0.0
        %v582 = vmul.f32 %v550, 1.442695
        %v583 = vpow.pop %v582
        %v584 = vmul.f32 %v551, 1.442695
        %v585 = vpow.pop %v584
        %v586 = vmul.f32 %v552, 1.442695
        %v587 = vpow.pop %v586
        %v588 = vmul.f32 %v553, 1.442695
        %v589 = vpow.pop %v588
        %v590 = vmul.f32 %v554, 1.442695
        %v591 = vpow.pop %v590
        %v592 = vmul.f32 %v555, 1.442695
        %v593 = vpow.pop %v592
        %v594 = vmul.f32 %v556, 1.442695
        %v595 = vpow.pop %v594
        %v596 = vmul.f32 %v557, 1.442695
        %v597 = vpow.pop %v596
        %v598 = vmul.f32 %v558, 1.442695
        %v599 = vpow.pop %v598
        %v600 = vmul.f32 %v559, 1.442695
        %v601 = vpow.pop %v600
        %v602 = vmul.f32 %v560, 1.442695
        %v603 = vpow.pop %v602
        %v604 = vmul.f32 %v561, 1.442695
        %v605 = vpow.pop %v604
        %v606 = vmul.f32 %v562, 1.442695
        %v607 = vpow.pop %v606
        %v608 = vmul.f32 %v563, 1.442695
        %v609 = vpow.pop %v608
        %v610 = vmul.f32 %v564, 1.442695
        %v611 = vpow.pop %v610
        %v612 = vmul.f32 %v565, 1.442695
        %v613 = vpow.pop %v612
        %v614 = vmul.f32 %v566, 1.442695
        %v615 = vpow.pop %v614
        %v616 = vmul.f32 %v567, 1.442695
        %v617 = vpow.pop %v616
        %v618 = vmul.f32 %v568, 1.442695
        %v619 = vpow.pop %v618
        %v620 = vmul.f32 %v569, 1.442695
        %v621 = vpow.pop %v620
        %v622 = vmul.f32 %v570, 1.442695
        %v623 = vpow.pop %v622
        %v624 = vmul.f32 %v571, 1.442695
        %v625 = vpow.pop %v624
        %v626 = vmul.f32 %v572, 1.442695
        %v627 = vpow.pop %v626
        %v628 = vmul.f32 %v573, 1.442695
        %v629 = vpow.pop %v628
        %v630 = vmul.f32 %v574, 1.442695
        %v631 = vpow.pop %v630
        %v632 = vmul.f32 %v575, 1.442695
        %v633 = vpow.pop %v632
        %v634 = vmul.f32 %v576, 1.442695
        %v635 = vpow.pop %v634
        %v636 = vmul.f32 %v577, 1.442695
        %v637 = vpow.pop %v636
        %v638 = vmul.f32 %v578, 1.442695
        %v639 = vpow.pop %v638
        %v640 = vmul.f32 %v579, 1.442695
        %v641 = vpow.pop %v640
        %v642 = vmul.f32 %v580, 1.442695
        %v643 = vpow.pop %v642
        %v644 = vmul.f32 %v581, 1.442695
        %v645 = vpow.pop %v644
        %v646 = vadd.f32 %v583, 1e-08
        %v647 = vadd.f32 %v585, 1e-08
        %v648 = vadd.f32 %v587, 1e-08
        %v649 = vadd.f32 %v589, 1e-08
        %v650 = vadd.f32 %v591, 1e-08
        %v651 = vadd.f32 %v593, 1e-08
        %v652 = vadd.f32 %v595, 1e-08
        %v653 = vadd.f32 %v597, 1e-08
        %v654 = vadd.f32 %v599, 1e-08
        %v655 = vadd.f32 %v601, 1e-08
        %v656 = vadd.f32 %v603, 1e-08
        %v657 = vadd.f32 %v605, 1e-08
        %v658 = vadd.f32 %v607, 1e-08
        %v659 = vadd.f32 %v609, 1e-08
        %v660 = vadd.f32 %v611, 1e-08
        %v661 = vadd.f32 %v613, 1e-08
        %v662 = vadd.f32 %v615, 1e-08
        %v663 = vadd.f32 %v617, 1e-08
        %v664 = vadd.f32 %v619, 1e-08
        %v665 = vadd.f32 %v621, 1e-08
        %v666 = vadd.f32 %v623, 1e-08
        %v667 = vadd.f32 %v625, 1e-08
        %v668 = vadd.f32 %v627, 1e-08
        %v669 = vadd.f32 %v629, 1e-08
        %v670 = vadd.f32 %v631, 1e-08
        %v671 = vadd.f32 %v633, 1e-08
        %v672 = vadd.f32 %v635, 1e-08
        %v673 = vadd.f32 %v637, 1e-08
        %v674 = vadd.f32 %v639, 1e-08
        %v675 = vadd.f32 %v641, 1e-08
        %v676 = vadd.f32 %v643, 1e-08
        %v677 = vadd.f32 %v645, 1e-08
        %v678 = vadd.f32 %v646, %v647
        %v679 = vadd.f32 %v648, %v649
        %v680 = vadd.f32 %v650, %v651
        %v681 = vadd.f32 %v652, %v653
        %v682 = vadd.f32 %v654, %v655
        %v683 = vadd.f32 %v656, %v657
        %v684 = vadd.f32 %v658, %v659
        %v685 = vadd.f32 %v660, %v661
        %v686 = vadd.f32 %v662, %v663
        %v687 = vadd.f32 %v664, %v665
        %v688 = vadd.f32 %v666, %v667
        %v689 = vadd.f32 %v668, %v669
        %v690 = vadd.f32 %v670, %v671
        %v691 = vadd.f32 %v672, %v673
        %v692 = vadd.f32 %v674, %v675
        %v693 = vadd.f32 %v676, %v677
        %p694 = scmp.eq.s32.totalorder %s21, 0
        // Predicated region
        $region29: #{tpu_custom_call.1} parent=27 // pred_check
          %p695 = pneg %p694
        $region30: #{tpu_custom_call.1} parent=27 // pred_check_branch
          %697 = sbr.rel (%p695) target = $region32
        $region31: #{tpu_custom_call.1} parent=27 // pred_region
          %698 = vst [vmem:[%s165] sm:$0xff] %v678
          %699 = vst [vmem:[%s165 + $0x8] sm:$0xff] %v679
          %700 = vst [vmem:[%s165 + $0x10] sm:$0xff] %v680
          %701 = vst [vmem:[%s165 + $0x18] sm:$0xff] %v681
          %702 = vst [vmem:[%s165 + $0x20] sm:$0xff] %v682
          %703 = vst [vmem:[%s165 + $0x28] sm:$0xff] %v683
          %704 = vst [vmem:[%s165 + $0x30] sm:$0xff] %v684
          %705 = vst [vmem:[%s165 + $0x38] sm:$0xff] %v685
          %706 = vst [vmem:[%s165 + $0x40] sm:$0xff] %v686
          %707 = vst [vmem:[%s165 + $0x48] sm:$0xff] %v687
          %708 = vst [vmem:[%s165 + $0x50] sm:$0xff] %v688
          %709 = vst [vmem:[%s165 + $0x58] sm:$0xff] %v689
          %710 = vst [vmem:[%s165 + $0x60] sm:$0xff] %v690
          %711 = vst [vmem:[%s165 + $0x68] sm:$0xff] %v691
          %712 = vst [vmem:[%s165 + $0x70] sm:$0xff] %v692
          %713 = vst [vmem:[%s165 + $0x78] sm:$0xff] %v693
        $region32: #{tpu_custom_call.1} parent=27 // pred_fallthru
          _
        %p714 = scmp.gt.s32.totalorder %s21, 0
        // Predicated region
        $region33: #{tpu_custom_call.1} parent=27 // pred_check
          %p715 = pneg %p714
        $region34: #{tpu_custom_call.1} parent=27 // pred_check_branch
          %717 = sbr.rel (%p715) target = $region36
        $region35: #{tpu_custom_call.1} parent=27 // pred_region
          %v718 = vld [vmem:[%s165] sm:$0xff]
          %v719 = vld [vmem:[%s165 + $0x8] sm:$0xff]
          %v720 = vld [vmem:[%s165 + $0x10] sm:$0xff]
          %v721 = vld [vmem:[%s165 + $0x18] sm:$0xff]
          %v722 = vld [vmem:[%s165 + $0x20] sm:$0xff]
          %v723 = vld [vmem:[%s165 + $0x28] sm:$0xff]
          %v724 = vld [vmem:[%s165 + $0x30] sm:$0xff]
          %v725 = vld [vmem:[%s165 + $0x38] sm:$0xff]
          %v726 = vld [vmem:[%s165 + $0x40] sm:$0xff]
          %v727 = vld [vmem:[%s165 + $0x48] sm:$0xff]
          %v728 = vld [vmem:[%s165 + $0x50] sm:$0xff]
          %v729 = vld [vmem:[%s165 + $0x58] sm:$0xff]
          %v730 = vld [vmem:[%s165 + $0x60] sm:$0xff]
          %v731 = vld [vmem:[%s165 + $0x68] sm:$0xff]
          %v732 = vld [vmem:[%s165 + $0x70] sm:$0xff]
          %v733 = vld [vmem:[%s165 + $0x78] sm:$0xff]
          %v734 = vadd.f32 %v718, %v678
          %v735 = vadd.f32 %v719, %v679
          %v736 = vadd.f32 %v720, %v680
          %v737 = vadd.f32 %v721, %v681
          %v738 = vadd.f32 %v722, %v682
          %v739 = vadd.f32 %v723, %v683
          %v740 = vadd.f32 %v724, %v684
          %v741 = vadd.f32 %v725, %v685
          %v742 = vadd.f32 %v726, %v686
          %v743 = vadd.f32 %v727, %v687
          %v744 = vadd.f32 %v728, %v688
          %v745 = vadd.f32 %v729, %v689
          %v746 = vadd.f32 %v730, %v690
          %v747 = vadd.f32 %v731, %v691
          %v748 = vadd.f32 %v732, %v692
          %v749 = vadd.f32 %v733, %v693
          %750 = vst [vmem:[%s165] sm:$0xff] %v734
          %751 = vst [vmem:[%s165 + $0x8] sm:$0xff] %v735
          %752 = vst [vmem:[%s165 + $0x10] sm:$0xff] %v736
          %753 = vst [vmem:[%s165 + $0x18] sm:$0xff] %v737
          %754 = vst [vmem:[%s165 + $0x20] sm:$0xff] %v738
          %755 = vst [vmem:[%s165 + $0x28] sm:$0xff] %v739
          %756 = vst [vmem:[%s165 + $0x30] sm:$0xff] %v740
          %757 = vst [vmem:[%s165 + $0x38] sm:$0xff] %v741
          %758 = vst [vmem:[%s165 + $0x40] sm:$0xff] %v742
          %759 = vst [vmem:[%s165 + $0x48] sm:$0xff] %v743
          %760 = vst [vmem:[%s165 + $0x50] sm:$0xff] %v744
          %761 = vst [vmem:[%s165 + $0x58] sm:$0xff] %v745
          %762 = vst [vmem:[%s165 + $0x60] sm:$0xff] %v746
          %763 = vst [vmem:[%s165 + $0x68] sm:$0xff] %v747
          %764 = vst [vmem:[%s165 + $0x70] sm:$0xff] %v748
          %765 = vst [vmem:[%s165 + $0x78] sm:$0xff] %v749
        $region36: #{tpu_custom_call.1} parent=27 // pred_fallthru
          _
        %s766 = sand.u32 %s88, 1
        %s767 = scalar_lea.sflag [#allocation3], %s766
        %s768 = sand.u32 %s88, 1
        %s769 = smul.addr %s768, 128
        %s770 = scalar_lea.vmem [#allocation2], %s769
        // Predicated region
        $region37: #{tpu_custom_call.1} parent=27 // pred_check
          %p771 = pneg %p98
        $region38: #{tpu_custom_call.1} parent=27 // pred_check_branch
          %773 = sbr.rel (%p771) target = $region40
        $region39: #{tpu_custom_call.1} parent=27 // pred_region
          %s774 = smul.u32 16, %s20
          %776 = vsyncadd %s767, 0
          %s777 = smul.addr %s774, 8
          %s778 = scalar_lea.hbm %s2, %s777
          %s779 = sshll.u32 %s770, 4
          %s780 = int_to_ptr.vmem [resolvable:$true] %s779
          %s781 = sshll.u32 %s778, 4
          %s782 = int_to_ptr.hbm [resolvable:$true] %s781
          %787 = dma.vmem_to_hbm [thread:$0]  %s780, 2048, %s782, %s767, 128, 128, 8
        $region40: #{tpu_custom_call.1} parent=27 // pred_fallthru
          _
      $region28: #{tpu_custom_call.1} parent=5 // pred_fallthru
        _
      %p788 = scmp.le.s32.totalorder 2, %s11
      // Predicated region
      $region41: #{tpu_custom_call.1} parent=5 // pred_check
        %p789 = pneg %p788
      $region42: #{tpu_custom_call.1} parent=5 // pred_check_branch
        %791 = sbr.rel (%p789) target = $region44
      $region43: #{tpu_custom_call.1} parent=5 // pred_region
        %s792 = ssub.s32 %s11, 2
        // Predicated region
        $region45: #{tpu_custom_call.1} parent=43 // pred_check
          %p793 = pneg %p104
        $region46: #{tpu_custom_call.1} parent=43 // pred_check_branch
          %795 = sbr.rel (%p793) target = $region48
        $region47: #{tpu_custom_call.1} parent=43 // pred_region
          %s796 = sand.u32 %s89, 1
          %s797 = scalar_lea.sflag [#allocation3], %s796
          %s798 = sand.u32 %s89, 1
          %s799 = smul.addr %s798, 128
          %s800 = scalar_lea.vmem [#allocation2], %s799
          %802 = dma.done %s797, 2048
        $region48: #{tpu_custom_call.1} parent=43 // pred_fallthru
          _
      $region44: #{tpu_custom_call.1} parent=5 // pred_fallthru
        _
    $region6: #{tpu_custom_call.1} parent=1 // loop_footer
      %s15 = sadd.s32 1, %s11
    $region7: #{tpu_custom_call.1} parent=1 // loop_footer_branch
      %10 = sbr.rel target = $region3
    $region8: #{tpu_custom_call.1} parent=1 // loop_exit
      _
    %803 = vsyncpa [#allocation3], 1
    %s804 = scalar_lea.sflag [#allocation3], 1
    %805 = vsyncpa %s804, 1

</llo_original>
